<compile_context>
chip_gen: v7x
topology: tpu7x:2x2x1
jax: 0.10.0
libtpu: 0.0.40
codegen_flags: <defaults>
</compile_context>

<pallas_src>
import functools

import jax
import jax.numpy as jnp
import numpy as np
from jax.experimental import pallas as pl
from jax.experimental.pallas import tpu as pltpu


def _adapter_kernel(x_ref, w_ref, shift_ref, out_ref, *, neg_slope):
    # x_ref:     [Rt, C_in]    (bf16)  row tile of flattened activations
    # w_ref:     [C_in, C_out] (bf16)  conv weight, transposed, BN scale pre-folded
    # shift_ref: [1, C_out]    (f32)   conv bias + BN shift, pre-folded
    # out_ref:   [Rt, C_out]   (f32)
    y = jnp.dot(x_ref[...], w_ref[...], preferred_element_type=jnp.float32)  # MXU, f32 acc
    y = y + shift_ref[...]                                                    # broadcast add
    # LeakyReLU
    out_ref[...] = jnp.where(y >= 0.0, y, jnp.float32(neg_slope) * y).astype(out_ref.dtype)


def transformer_adapter(decoded, conv_w, conv_b,
                        bn_gamma=None, bn_beta=None, bn_mean=None, bn_var=None,
                        *, bn=True, eps=1e-5, neg_slope=0.01, row_tile=2048):
    """Equivalent of TransformerAdapter.forward(decoded) (eval mode).

    decoded : [B, L, C_in]  (the module transposes to [B, C_in, L] internally; folded away)
    conv_w  : [C_out, C_in, 1]   (PyTorch Conv1d weight)
    conv_b  : [C_out]
    bn_*    : BatchNorm1d eval-mode parameters / running stats, each [C_out]
    """
    B, L, C_in = decoded.shape
    C_out = conv_w.shape[0]
    assert conv_w.shape == (C_out, C_in, 1)

    # Fold conv bias + eval-mode BatchNorm into per-channel scale/shift,
    # then fold the scale straight into the matmul weight.
    conv_b = conv_b.astype(jnp.float32)
    w_t = jnp.transpose(conv_w[:, :, 0]).astype(jnp.float32)        # [C_in, C_out]
    if bn:
        scale = bn_gamma.astype(jnp.float32) / jnp.sqrt(bn_var.astype(jnp.float32) + eps)
        shift = bn_beta.astype(jnp.float32) + scale * (conv_b - bn_mean.astype(jnp.float32))
        w_fused = (w_t * scale[None, :]).astype(jnp.bfloat16)       # scale folded into weight
    else:
        shift = conv_b
        w_fused = w_t.astype(jnp.bfloat16)
    shift = shift.reshape(1, C_out)                                 # [1, C_out], f32

    # Flatten batch*seq rows; channels stay on the lane axis (no transposes needed).
    N = B * L
    x2 = decoded.reshape(N, C_in).astype(jnp.bfloat16)

    # Row tiling: single block when it all fits, else 8-aligned tiles with
    # Pallas handling the ragged last block (masked partial writes).
    rt = N if N <= row_tile else row_tile
    grid = (pl.cdiv(N, rt),)

    kernel = functools.partial(_adapter_kernel, neg_slope=neg_slope)

    out = pl.pallas_call(
        kernel,
        out_shape=jax.ShapeDtypeStruct((N, C_out), jnp.float32),
        grid_spec=pltpu.PrefetchScalarGridSpec(
            num_scalar_prefetch=0,
            grid=grid,
            in_specs=[
                pl.BlockSpec((rt, C_in), lambda i: (i, 0)),         # activation row tiles
                pl.BlockSpec((C_in, C_out), lambda i: (0, 0)),      # fused weight (resident)
                pl.BlockSpec((1, C_out), lambda i: (0, 0)),         # fused shift (resident)
            ],
            out_specs=pl.BlockSpec((rt, C_out), lambda i: (i, 0)),
        ),
        compiler_params=pltpu.CompilerParams(dimension_semantics=("parallel",)),
    )(x2, w_fused, shift)

    return out.reshape(B, L, C_out)


def _reference(decoded, conv_w, conv_b, bn_gamma, bn_beta, bn_mean, bn_var,
               *, bn=True, eps=1e-5, neg_slope=0.01):
    """Pure-JAX reference mirroring the PyTorch module (eval mode) exactly."""
    # transpose(1,2) -> Conv1d(k=1) -> BN1d(eval) -> LeakyReLU -> transpose(1,2)
    y = jnp.einsum("blc,oc->blo", decoded, conv_w[:, :, 0]) + conv_b
    if bn:
        y = (y - bn_mean) / jnp.sqrt(bn_var + eps) * bn_gamma + bn_beta
    return jnp.where(y >= 0.0, y, neg_slope * y)


if __name__ == "__main__":
    # Small shapes consistent with the module: decoded is [batch, seq, in_channels].
    B, L, C_in, C_out = 2, 8, 32, 64

    root = jax.random.PRNGKey(0)
    kx, kw, kb, kg, kbt, km, kv = jax.random.split(root, 7)

    decoded = jax.random.normal(kx, (B, L, C_in), dtype=jnp.float32)

    bound = 1.0 / np.sqrt(C_in)  # PyTorch Conv1d default init range
    conv_w = jax.random.uniform(kw, (C_out, C_in, 1), minval=-bound, maxval=bound,
                                dtype=jnp.float32)
    conv_b = jax.random.uniform(kb, (C_out,), minval=-bound, maxval=bound,
                                dtype=jnp.float32)

    bn_gamma = 1.0 + 0.1 * jax.random.normal(kg, (C_out,), dtype=jnp.float32)
    bn_beta = 0.1 * jax.random.normal(kbt, (C_out,), dtype=jnp.float32)
    bn_mean = 0.1 * jax.random.normal(km, (C_out,), dtype=jnp.float32)
    bn_var = jax.random.uniform(kv, (C_out,), minval=0.5, maxval=1.5, dtype=jnp.float32)

    out = transformer_adapter(decoded, conv_w, conv_b,
                              bn_gamma, bn_beta, bn_mean, bn_var, bn=True)
    out = jax.block_until_ready(out)

    ref = _reference(decoded, conv_w, conv_b, bn_gamma, bn_beta, bn_mean, bn_var, bn=True)
    np.testing.assert_allclose(np.asarray(out), np.asarray(ref), rtol=2e-2, atol=2e-2)

    print("KERNEL_OK")
</pallas_src>

<mosaic_0001>
module attributes {stable_mosaic.version = 11 : i64} {
  func.func @_adapter_kernel(%arg0: i32, %arg1: memref<16x32xbf16, #tpu.memory_space<vmem>>, %arg2: memref<32x64xbf16, #tpu.memory_space<vmem>>, %arg3: memref<1x64xf32, #tpu.memory_space<vmem>>, %arg4: memref<16x64xf32, #tpu.memory_space<vmem>>) attributes {dimension_semantics = [#tpu.dimension_semantics<parallel>], iteration_bounds = array<i64: 1>, scalar_prefetch = 0 : i64, scratch_operands = 0 : i64, tpu.core_type = #tpu.core_type<tc>, window_params = [{transform_indices = @transform_0, window_bounds = array<i64: 16, 32>}, {pipeline_mode = #tpu.pipeline_mode<synchronous>, transform_indices = @transform_1, window_bounds = array<i64: 32, 64>}, {pipeline_mode = #tpu.pipeline_mode<synchronous>, transform_indices = @transform_2, window_bounds = array<i64: 1, 64>}, {transform_indices = @transform_3, window_bounds = array<i64: 16, 64>}]} {
    %c0 = arith.constant 0 : index
    %c0_0 = arith.constant 0 : index
    %0 = vector.load %arg1[%c0, %c0_0] : memref<16x32xbf16, #tpu.memory_space<vmem>>, vector<16x32xbf16>
    %c0_1 = arith.constant 0 : index
    %c0_2 = arith.constant 0 : index
    %1 = vector.load %arg2[%c0_1, %c0_2] : memref<32x64xbf16, #tpu.memory_space<vmem>>, vector<32x64xbf16>
    %cst = arith.constant dense<0.000000e+00> : vector<16x64xf32>
    %2 = tpu.matmul %0, %1, %cst {dimension_numbers = #tpu.dot_dimension_numbers<[1], [0], [0], [1], [0, 0, 1, 1], [], []>} : vector<16x32xbf16>, vector<32x64xbf16>, vector<16x64xf32> -> vector<16x64xf32>
    %c0_3 = arith.constant 0 : index
    %c0_4 = arith.constant 0 : index
    %3 = vector.load %arg3[%c0_3, %c0_4] : memref<1x64xf32, #tpu.memory_space<vmem>>, vector<1x64xf32>
    %4 = vector.broadcast %3 : vector<1x64xf32> to vector<16x64xf32>
    %5 = arith.addf %2, %4 : vector<16x64xf32>
    %cst_5 = arith.constant 0.000000e+00 : f32
    %6 = vector.broadcast %cst_5 : f32 to vector<16x64xf32>
    %7 = arith.cmpf oge, %5, %6 : vector<16x64xf32>
    %cst_6 = arith.constant 0.00999999977 : f32
    %8 = vector.broadcast %cst_6 : f32 to vector<16x64xf32>
    %9 = arith.mulf %8, %5 : vector<16x64xf32>
    %10 = arith.select %7, %5, %9 : vector<16x64xi1>, vector<16x64xf32>
    %c0_7 = arith.constant 0 : index
    %c0_8 = arith.constant 0 : index
    %11 = vector.load %arg4[%c0_7, %c0_8] : memref<16x64xf32, #tpu.memory_space<vmem>>, vector<16x64xf32>
    tpu.vector_store %arg4[%c0_7, %c0_8], %10 {strides = array<i32>} : memref<16x64xf32, #tpu.memory_space<vmem>>, vector<16x64xf32>,
    return
  }
  func.func @transform_0(%arg0: i32) -> (i32, i32) {
    %c0_i32 = arith.constant 0 : i32
    %c0_i32_0 = arith.constant 0 : i32
    return %arg0, %c0_i32 : i32, i32
  }
  func.func @transform_1(%arg0: i32) -> (i32, i32) {
    %c0_i32 = arith.constant 0 : i32
    %c0_i32_0 = arith.constant 0 : i32
    %c0_i32_1 = arith.constant 0 : i32
    return %c0_i32, %c0_i32_0 : i32, i32
  }
  func.func @transform_2(%arg0: i32) -> (i32, i32) {
    %c0_i32 = arith.constant 0 : i32
    %c0_i32_0 = arith.constant 0 : i32
    %c0_i32_1 = arith.constant 0 : i32
    return %c0_i32, %c0_i32_0 : i32, i32
  }
  func.func @transform_3(%arg0: i32) -> (i32, i32) {
    %c0_i32 = arith.constant 0 : i32
    %c0_i32_0 = arith.constant 0 : i32
    return %arg0, %c0_i32 : i32, i32
  }
}

</mosaic_0001>

<llo_original>
// kernel: tpu_custom_call.1
$region0: #{tpu_custom_call.1}
  #allocation0 [shape = 'u32[]', space=smem, size = 0x4, offset = 0x4, fixed_abs, tag = 'smem constant byte address 0x4 - core index']
  #allocation1 [shape = 'u32[144,128]{1,0:T(1,128)}', space=vmem, size = 0x12000, scoped, tag = 'internal scratch']
  %s0 = inlined_call_operand.hbm [shape: bf16[16,32], index: 0, kind: input, shape index: {}]
  %s1 = inlined_call_operand.hbm [shape: bf16[32,64], index: 1, kind: input, shape index: {}]
  %s2 = inlined_call_operand.vmem [shape: f32[1,64], index: 2, kind: input, shape index: {}]
  %s3 = inlined_call_operand.hbm [shape: f32[16,64], index: 3, kind: output, shape index: {}]
  %s4 = sld [smem:[#allocation0]]
  $region30: #{tpu_custom_call.1} parent=0
    _
  %s6 = ssub.s32 1, %s4
  %s7 = scalar_select 0, %s6, %s4
  $region1: #{tpu_custom_call.1} parent=0
    #allocation2 [shape = 'u8[4096]{0}', space=vmem, size = 0x1000, scoped, tag = 'input window, operand 0, single buffered']
    #allocation3 [shape = 's32[1]{0}', space=sflag, size = 0x4, scoped, tag = 'scoped memory for tpu_custom_call.1']
    #allocation4 [shape = 's32[1]{0}', space=sflag, size = 0x4, scoped, tag = 'scoped memory for tpu_custom_call.1']
    #allocation5 [shape = 'u8[8192]{0}', space=vmem, size = 0x2000, scoped, tag = 'input window, operand 1, single buffered']
    #allocation6 [shape = 's32[1]{0}', space=sflag, size = 0x4, scoped, tag = 'scoped memory for tpu_custom_call.1']
    #allocation7 [shape = 'u8[8192]{0}', space=vmem, size = 0x2000, scoped, tag = 'output window, operand 0, single buffered']
    %8 = vsyncpa [#allocation3], 0
    %9 = vsyncpa [#allocation6], 0
    %10 = vsyncpa [#allocation4], 0
    // Predicated region
    $region2: #{tpu_custom_call.1} parent=1 // pred_check
      _
    $region3: #{tpu_custom_call.1} parent=1 // pred_check_branch
      %12 = sbr.rel (0) target = $region5
    $region4: #{tpu_custom_call.1} parent=1 // pred_region
      %s14 = ssub.s32 128, 128
      %15 = vsyncadd [#allocation3], %s14
      %s16 = sshll.u32 [#allocation2], 4
      %s17 = int_to_ptr.vmem [resolvable:$true] %s16
      %22 = dma.hbm_to_vmem [thread:$0]  %s0, 128, %s17, [#allocation3], 64, 64, 4
    $region5: #{tpu_custom_call.1} parent=1 // pred_fallthru
      _
    // Predicated region
    $region6: #{tpu_custom_call.1} parent=1 // pred_check
      _
    $region7: #{tpu_custom_call.1} parent=1 // pred_check_branch
      %24 = sbr.rel (0) target = $region9
    $region8: #{tpu_custom_call.1} parent=1 // pred_region
      %s26 = ssub.s32 256, 256
      %27 = vsyncadd [#allocation6], %s26
      %s28 = sshll.u32 [#allocation5], 4
      %s29 = int_to_ptr.vmem [resolvable:$true] %s28
      %34 = dma.hbm_to_vmem [thread:$0]  %s1, 256, %s29, [#allocation6], 64, 64, 4
    $region9: #{tpu_custom_call.1} parent=1 // pred_fallthru
      _
    // Predicated region
    $region10: #{tpu_custom_call.1} parent=1 // pred_check
      _
    $region11: #{tpu_custom_call.1} parent=1 // pred_check_branch
      %36 = sbr.rel (0) target = $region13
    $region12: #{tpu_custom_call.1} parent=1 // pred_region
      _
    $region13: #{tpu_custom_call.1} parent=1 // pred_fallthru
      _
    // Predicated region
    $region14: #{tpu_custom_call.1} parent=1 // pred_check
      _
    $region15: #{tpu_custom_call.1} parent=1 // pred_check_branch
      %38 = sbr.rel (0) target = $region17
    $region16: #{tpu_custom_call.1} parent=1 // pred_region
      %39 = dma.done [#allocation3], 128
    $region17: #{tpu_custom_call.1} parent=1 // pred_fallthru
      _
    // Predicated region
    $region18: #{tpu_custom_call.1} parent=1 // pred_check
      _
    $region19: #{tpu_custom_call.1} parent=1 // pred_check_branch
      %41 = sbr.rel (0) target = $region21
    $region20: #{tpu_custom_call.1} parent=1 // pred_region
      %42 = dma.done [#allocation6], 256
    $region21: #{tpu_custom_call.1} parent=1 // pred_fallthru
      _
    %v44 = vld [vmem:[#allocation2] sm:$0xf]
    %v45 = vld [vmem:[#allocation2 + $0x4] sm:$0xf]
    %v46 = vld [vmem:[#allocation5] sm:$0xf]
    %v47 = vld [vmem:[#allocation5 + $0x4] sm:$0xf]
    %v48 = vld [vmem:[#allocation5 + $0x8] sm:$0xf]
    %v49 = vld [vmem:[#allocation5 + $0xc] sm:$0xf]
    %v50 = vld [vmem:[%s2] sm:$0x1]
    %v52 = vlaneseq
    %v53 = vshrl.u32 %v52, 7
    %v54 = vsub.s32 0, %v53
    %v55 = vrot.slane %v50, %v54
    %v59 = vunpack.c.l.b16 %v44
    %v60 = vunpack.c.l.b16 %v45
    %v61 = vpack.c.b16 %v60, %v59
    %v66 = vunpack.c.l.b16 %v46
    %v67 = vunpack.c.l.b16 %v47
    %v68 = vunpack.c.l.b16 %v48
    %v69 = vunpack.c.l.b16 %v49
    %v70 = vpack.c.b16 %v67, %v66
    %v71 = vpack.c.b16 %v69, %v68
    %vm74 = vcmask 261120
    %v76 = vsel %vm74, %v61, 0
    %78 = vmatprep.subr.bf16.mxu0 0
    %79 = vmatpush1.bf16.msra.mxu0 %v70
    %80 = vmatprep.subr.bf16.mxu0 0
    %81 = vmatpush1.bf16.msra.mxu0 %v71
    %82 = vmatprep.subr.bf16.mxu0 0
    %83 = vmatpush1.bf16.msra.mxu0 0
    %84 = vmatprep.subr.bf16.mxu0 0
    %85 = vmatpush1.bf16.msra.mxu0 0
    %86 = vmatprep.subr.bf16.mxu0 0
    %87 = vmatpush1.bf16.msra.mxu0 0
    %88 = vmatprep.subr.bf16.mxu0 0
    %89 = vmatpush1.bf16.msra.mxu0 0
    %90 = vmatprep.subr.bf16.mxu0 0
    %91 = vmatpush1.bf16.msra.mxu0 0
    %92 = vmatprep.subr.bf16.mxu0 0
    %93 = vmatpush1.bf16.msra.mxu0 0
    %94 = vmatprep.subr.bf16.mxu0 0
    %95 = vmatpush1.bf16.msra.mxu0 0
    %96 = vmatprep.subr.bf16.mxu0 0
    %97 = vmatpush1.bf16.msra.mxu0 0
    %98 = vmatprep.subr.bf16.mxu0 0
    %99 = vmatpush1.bf16.msra.mxu0 0
    %100 = vmatprep.subr.bf16.mxu0 0
    %101 = vmatpush1.bf16.msra.mxu0 0
    %102 = vmatprep.subr.bf16.mxu0 0
    %103 = vmatpush1.bf16.msra.mxu0 0
    %104 = vmatprep.subr.bf16.mxu0 0
    %105 = vmatpush1.bf16.msra.mxu0 0
    %106 = vmatprep.subr.bf16.mxu0 0
    %107 = vmatpush1.bf16.msra.mxu0 0
    %108 = vmatprep.subr.bf16.mxu0 0
    %109 = vmatpush1.bf16.msra.mxu0 0
    %110 = vmatprep.mubr.bf16.mxu0 0
    %111 = vmatmul.mubr.bf16.gmra.mrb[0].mxu0 %v76
    %v112 = vpop.f32.mrb[0].mxu0
    %v113 = vadd.f32 %v55, %v112
    %v114 = vpop.f32.mrb[0].mxu0
    %v115 = vpop.f32.mrb[0].mxu0
    %v116 = vadd.f32 %v55, %v115
    %v117 = vpop.f32.mrb[0].mxu0
    %118 = vdwg.mxu0
    %vm119 = vcmp.ge.f32.partialorder %v113, 0.0
    %vm120 = vcmp.ge.f32.partialorder %v116, 0.0
    %v121 = vmul.f32 %v113, 0.01
    %v122 = vmul.f32 %v116, 0.01
    %v123 = vsel %vm119, %v113, %v121
    %v124 = vsel %vm120, %v116, %v122
    %vm125 = vcmask 523264
    %126 = vst.msk [vmem:[#allocation7] sm:$0xff] %vm125, %v123
    %127 = vst.msk [vmem:[#allocation7 + $0x8] sm:$0xff] %vm125, %v124
    // Predicated region
    $region22: #{tpu_custom_call.1} parent=1 // pred_check
      _
    $region23: #{tpu_custom_call.1} parent=1 // pred_check_branch
      %129 = sbr.rel (0) target = $region25
    $region24: #{tpu_custom_call.1} parent=1 // pred_region
      %s131 = ssub.s32 256, 256
      %132 = vsyncadd [#allocation4], %s131
      %s133 = sshll.u32 [#allocation7], 4
      %s134 = int_to_ptr.vmem [resolvable:$true] %s133
      %139 = dma.vmem_to_hbm [thread:$0]  %s134, 256, %s3, [#allocation4], 128, 128, 8
    $region25: #{tpu_custom_call.1} parent=1 // pred_fallthru
      _
    // Predicated region
    $region26: #{tpu_custom_call.1} parent=1 // pred_check
      _
    $region27: #{tpu_custom_call.1} parent=1 // pred_check_branch
      %141 = sbr.rel (0) target = $region29
    $region28: #{tpu_custom_call.1} parent=1 // pred_region
      %142 = dma.done [#allocation4], 256
    $region29: #{tpu_custom_call.1} parent=1 // pred_fallthru
      _
    %143 = vsyncpa [#allocation3], 1
    %144 = vsyncpa [#allocation6], 1
    %145 = vsyncpa [#allocation4], 1

</llo_original>
